<compile_context>
chip_gen: v7x
topology: tpu7x:2x2x1
jax: 0.10.0
libtpu: 0.0.40
codegen_flags: <defaults>
</compile_context>

<pallas_src>
import functools

import jax
import jax.numpy as jnp
from jax.experimental import pallas as pl
from jax.experimental.pallas import tpu as pltpu

SELU_ALPHA = 1.6732632423543772
SELU_SCALE = 1.0507009873554805
BN_EPS = 1e-5
COS_EPS = 1e-8


def _round_up(x, m):
    return ((x + m - 1) // m) * m


def _ffn02_kernel(out_size,
                  posts_ref, replies_ref,
                  pmean_ref, pinv_ref, rmean_ref, rinv_ref,
                  wp_ref, bp_ref, wr_ref, br_ref,
                  wop_ref, wor_ref, woc_ref, bo_ref,
                  out_ref):
    def selu(x):
        return SELU_SCALE * jnp.where(x > 0, x, SELU_ALPHA * (jnp.exp(x) - 1.0))

    # BatchNorm1d(affine=False): batch statistics were hoisted to the wrapper.
    p = (posts_ref[...] - pmean_ref[...]) * pinv_ref[...]
    r = (replies_ref[...] - rmean_ref[...]) * rinv_ref[...]

    # Linear -> AlphaDropout(identity) -> SELU.  bf16 MXU operands, f32 accum.
    # Padded weight columns / biases are zero, so padded lanes stay exactly 0.
    p = selu(jnp.dot(p.astype(jnp.bfloat16), wp_ref[...],
                     preferred_element_type=jnp.float32) + bp_ref[...])
    r = selu(jnp.dot(r.astype(jnp.bfloat16), wr_ref[...],
                     preferred_element_type=jnp.float32) + br_ref[...])

    # cosine_similarity(ZeroPad2d(p), r): zero-padded lanes contribute nothing
    # to either the dot product or the norms, so this matches the reference.
    num = jnp.sum(p * r, axis=1, keepdims=True)
    p_nrm = jnp.maximum(jnp.sqrt(jnp.sum(p * p, axis=1, keepdims=True)), COS_EPS)
    r_nrm = jnp.maximum(jnp.sqrt(jnp.sum(r * r, axis=1, keepdims=True)), COS_EPS)
    cos = num / (p_nrm * r_nrm)

    # out Linear on cat([p_pad, r, cos]) folded into two lane-dense matmuls
    # plus an f32 rank-1 term for the cosine column.
    logits = (jnp.dot(p.astype(jnp.bfloat16), wop_ref[...],
                      preferred_element_type=jnp.float32)
              + jnp.dot(r.astype(jnp.bfloat16), wor_ref[...],
                        preferred_element_type=jnp.float32)
              + cos * woc_ref[...]
              + bo_ref[...])

    # log_softmax over the real output lanes only (padded lanes masked off).
    lane = jax.lax.broadcasted_iota(jnp.int32, logits.shape, 1)
    logits = jnp.where(lane < out_size, logits, jnp.float32(-1e30))
    m = jnp.max(logits, axis=1, keepdims=True)
    z = logits - m
    lse = jnp.log(jnp.sum(jnp.exp(z), axis=1, keepdims=True))
    # Only the real output columns are written back (8 B/row, not 512 B/row).
    out_ref[...] = z[:, :out_size] - lse


def _choose_batch_tiling(B, max_tile=512):
    """Pick (tile_b, grid, b_pad).

    Chooses the tile COUNT first (>=2 steps whenever B allows it, more for
    large B) so the grid actually pipelines / shards across v7x's two
    TensorCores, then sizes tile_b = round_up(B / n_tiles, 16) so batch
    padding stays under one 16-row group per tile.
    """
    n_tiles = max(2, pl.cdiv(B, max_tile))
    tile_b = _round_up(pl.cdiv(B, n_tiles), 16)
    grid = pl.cdiv(B, tile_b)
    return tile_b, grid, tile_b * grid


@functools.partial(jax.jit, static_argnames=("output_size",))
def ffn02_forward(posts, replies, params, *, output_size):
    """Pallas TPU forward for FFN02.

    posts:   (B, post_input_size)  f32
    replies: (B, reply_input_size) f32
    params:  dict from prepare_params (pre-transposed, lane-padded, bf16 MXU
             weights + f32 biases).
    """
    B, post_in = posts.shape
    _, reply_in = replies.shape
    lpad = params["wp"].shape[1]        # padded layer width (multiple of 128)
    out_pad = params["wop"].shape[1]    # padded logits width (multiple of 128)

    # BatchNorm1d training-mode batch statistics (biased variance), computed
    # in a single fused pass over the inputs: var = E[x^2] - E[x]^2, clamped.
    def bn_stats(x):
        mean = jnp.mean(x, axis=0, keepdims=True)
        msq = jnp.mean(jnp.square(x), axis=0, keepdims=True)
        var = jnp.maximum(msq - jnp.square(mean), 0.0)
        return mean, jax.lax.rsqrt(var + BN_EPS)

    p_mean, p_inv = bn_stats(posts)
    r_mean, r_inv = bn_stats(replies)

    tile_b, grid_b, b_pad = _choose_batch_tiling(B)
    if b_pad != B:
        posts_p = jnp.pad(posts, ((0, b_pad - B), (0, 0)))
        replies_p = jnp.pad(replies, ((0, b_pad - B), (0, 0)))
    else:
        posts_p, replies_p = posts, replies

    def tiled(arr):
        return pl.BlockSpec((tile_b, arr.shape[1]), lambda i: (i, 0))

    def resident(arr):
        return pl.BlockSpec(arr.shape, lambda i: (0, 0))

    args = (posts_p, replies_p, p_mean, p_inv, r_mean, r_inv,
            params["wp"], params["bp"], params["wr"], params["br"],
            params["wop"], params["wor"], params["woc"], params["bo"])
    in_specs = [tiled(posts_p), tiled(replies_p)] + [resident(a) for a in args[2:]]

    # Explicit VMEM budget: double-buffered streaming operands, residents
    # conservatively counted twice, plus (tile_b, lpad) f32/bf16 intermediates
    # and slack.  Raises v5e's 16 MiB default scoped limit when needed.
    resident_bytes = sum(int(a.size) * a.dtype.itemsize for a in args[2:])
    stream_bytes = tile_b * (post_in + reply_in + output_size) * 4
    interm_bytes = tile_b * lpad * (4 + 2) * 2 + tile_b * out_pad * 4
    vmem_est = 2 * stream_bytes + 2 * resident_bytes + interm_bytes + (4 << 20)
    vmem_limit = int(min(max(vmem_est, 32 << 20), 100 << 20))

    flops = 2 * b_pad * lpad * (post_in + reply_in + 2 * out_pad)
    transcendentals = b_pad * (2 * lpad + out_pad)
    bytes_accessed = (
        4 * b_pad * (post_in + reply_in + output_size)
        + 2 * (params["wp"].size + params["wr"].size
               + params["wop"].size + params["wor"].size)
        + 4 * (params["bp"].size + params["br"].size
               + params["woc"].size + params["bo"].size
               + 2 * (post_in + reply_in)))

    out = pl.pallas_call(
        functools.partial(_ffn02_kernel, output_size),
        out_shape=jax.ShapeDtypeStruct((b_pad, output_size), jnp.float32),
        grid=(grid_b,),
        in_specs=in_specs,
        out_specs=pl.BlockSpec((tile_b, output_size), lambda i: (i, 0)),
        compiler_params=pltpu.CompilerParams(
            dimension_semantics=("parallel",),
            vmem_limit_bytes=vmem_limit),
        cost_estimate=pl.CostEstimate(flops=int(flops),
                                      transcendentals=int(transcendentals),
                                      bytes_accessed=int(bytes_accessed)),
    )(*args)

    return out[:B]


def init_module_params(key, post_input_size, reply_input_size,
                       post_layer_size, reply_layer_size, output_size=2):
    """Synthetic init mirroring the PyTorch module (xavier_normal weights,
    default Linear bias init).  Returned in PyTorch layout (out, in)."""
    if reply_layer_size <= post_layer_size:
        raise ValueError("Condition not fulfilled: reply_layer_size <= post_layer_size")
    ks = jax.random.split(key, 6)

    def xavier_normal(k, fan_out, fan_in):
        std = (2.0 / (fan_in + fan_out)) ** 0.5
        return std * jax.random.normal(k, (fan_out, fan_in), jnp.float32)

    def linear_bias(k, fan_in, fan_out):
        bound = 1.0 / (fan_in ** 0.5)
        return jax.random.uniform(k, (fan_out,), jnp.float32,
                                  minval=-bound, maxval=bound)

    cat = 2 * reply_layer_size + 1
    return dict(
        w_post=xavier_normal(ks[0], post_layer_size, post_input_size),
        b_post=linear_bias(ks[1], post_input_size, post_layer_size),
        w_reply=xavier_normal(ks[2], reply_layer_size, reply_input_size),
        b_reply=linear_bias(ks[3], reply_input_size, reply_layer_size),
        w_out=xavier_normal(ks[4], output_size, cat),
        b_out=linear_bias(ks[5], cat, output_size),
    )


def prepare_params(raw, post_layer_size, reply_layer_size, output_size):
    """Transpose weights to (in, out), zero-pad all layer widths to multiples
    of 128 lanes, split the output weight into its post/reply/cosine pieces,
    and cast MXU operands to bf16 (biases stay f32)."""
    P, R = post_layer_size, reply_layer_size
    lpad = _round_up(R, 128)
    out_pad = _round_up(output_size, 128)
    post_in = raw["w_post"].shape[1]
    reply_in = raw["w_reply"].shape[1]

    wp = jnp.zeros((post_in, lpad), jnp.float32).at[:, :P].set(raw["w_post"].T)
    bp = jnp.zeros((1, lpad), jnp.float32).at[:, :P].set(raw["b_post"][None, :])
    wr = jnp.zeros((reply_in, lpad), jnp.float32).at[:, :R].set(raw["w_reply"].T)
    br = jnp.zeros((1, lpad), jnp.float32).at[:, :R].set(raw["b_reply"][None, :])

    wo_t = raw["w_out"].T                                     # (2R+1, out)
    wop = jnp.zeros((lpad, out_pad), jnp.float32).at[:R, :output_size].set(wo_t[:R])
    wor = jnp.zeros((lpad, out_pad), jnp.float32).at[:R, :output_size].set(wo_t[R:2 * R])
    woc = jnp.zeros((1, out_pad), jnp.float32).at[:, :output_size].set(wo_t[2 * R:])
    bo = jnp.zeros((1, out_pad), jnp.float32).at[:, :output_size].set(raw["b_out"][None, :])

    return dict(
        wp=wp.astype(jnp.bfloat16), bp=bp,
        wr=wr.astype(jnp.bfloat16), br=br,
        wop=wop.astype(jnp.bfloat16), wor=wor.astype(jnp.bfloat16),
        woc=woc, bo=bo,
    )


def ffn02_reference(posts, replies, raw, post_layer_size, reply_layer_size,
                    mxu_dtype=jnp.float32):
    """Pure-JAX reference mirroring FFN02.forward.  With mxu_dtype=bf16 it
    also mirrors the kernel's MXU operand rounding."""
    def selu(x):
        return SELU_SCALE * jnp.where(x > 0, x, SELU_ALPHA * (jnp.exp(x) - 1.0))

    def bn(x):
        mean = jnp.mean(x, axis=0, keepdims=True)
        var = jnp.mean(jnp.square(x - mean), axis=0, keepdims=True)
        return (x - mean) * jax.lax.rsqrt(var + BN_EPS)

    def mm(a, b):
        return jnp.dot(a.astype(mxu_dtype), b.astype(mxu_dtype),
                       preferred_element_type=jnp.float32)

    P, R = post_layer_size, reply_layer_size
    p = selu(mm(bn(posts), raw["w_post"].T) + raw["b_post"][None, :])
    r = selu(mm(bn(replies), raw["w_reply"].T) + raw["b_reply"][None, :])
    p_pad = jnp.pad(p, ((0, 0), (0, R - P)))
    num = jnp.sum(p_pad * r, axis=1, keepdims=True)
    p_nrm = jnp.maximum(jnp.linalg.norm(p_pad, axis=1, keepdims=True), COS_EPS)
    r_nrm = jnp.maximum(jnp.linalg.norm(r, axis=1, keepdims=True), COS_EPS)
    cos = num / (p_nrm * r_nrm)
    wo_t = raw["w_out"].T
    logits = (mm(p_pad, wo_t[:R]) + mm(r, wo_t[R:2 * R])
              + cos * wo_t[2 * R:] + raw["b_out"][None, :])
    return jax.nn.log_softmax(logits, axis=1)


if __name__ == "__main__":
    # Small, shape-consistent config (reply_layer_size > post_layer_size).
    batch = 8
    post_input_size = 16
    reply_input_size = 24
    post_layer_size = 24
    reply_layer_size = 32
    output_size = 2
    # post_dropout = reply_dropout = 0.0 -> AlphaDropout is the identity.

    key = jax.random.PRNGKey(0)
    kx, kr, kp = jax.random.split(key, 3)
    posts = jax.random.normal(kx, (batch, post_input_size), jnp.float32)
    replies = jax.random.normal(kr, (batch, reply_input_size), jnp.float32)

    raw = init_module_params(kp, post_input_size, reply_input_size,
                             post_layer_size, reply_layer_size, output_size)
    params = prepare_params(raw, post_layer_size, reply_layer_size, output_size)

    out = ffn02_forward(posts, replies, params, output_size=output_size)
    out = jax.block_until_ready(out)

    ref_matched = ffn02_reference(posts, replies, raw,
                                  post_layer_size, reply_layer_size,
                                  mxu_dtype=jnp.bfloat16)
    ref_f32 = ffn02_reference(posts, replies, raw,
                              post_layer_size, reply_layer_size,
                              mxu_dtype=jnp.float32)

    assert out.shape == (batch, output_size)
    assert bool(jnp.all(jnp.isfinite(out))), "non-finite output"
    assert jnp.allclose(out, ref_matched, atol=2e-3, rtol=2e-3), \
        "mismatch vs bf16-matched reference"
    assert jnp.allclose(out, ref_f32, atol=1e-1, rtol=1e-1), \
        "mismatch vs f32 reference"

    print("KERNEL_OK")
</pallas_src>

<mosaic_0001>
module attributes {stable_mosaic.version = 11 : i64} {
  func.func @_ffn02_kernel(%arg0: i32, %arg1: memref<16x16xf32, #tpu.memory_space<vmem>>, %arg2: memref<16x24xf32, #tpu.memory_space<vmem>>, %arg3: memref<1x16xf32, #tpu.memory_space<vmem>>, %arg4: memref<1x16xf32, #tpu.memory_space<vmem>>, %arg5: memref<1x24xf32, #tpu.memory_space<vmem>>, %arg6: memref<1x24xf32, #tpu.memory_space<vmem>>, %arg7: memref<16x128xbf16, #tpu.memory_space<vmem>>, %arg8: memref<1x128xf32, #tpu.memory_space<vmem>>, %arg9: memref<24x128xbf16, #tpu.memory_space<vmem>>, %arg10: memref<1x128xf32, #tpu.memory_space<vmem>>, %arg11: memref<128x128xbf16, #tpu.memory_space<vmem>>, %arg12: memref<128x128xbf16, #tpu.memory_space<vmem>>, %arg13: memref<1x128xf32, #tpu.memory_space<vmem>>, %arg14: memref<1x128xf32, #tpu.memory_space<vmem>>, %arg15: memref<16x2xf32, #tpu.memory_space<vmem>>) attributes {dimension_semantics = [#tpu.dimension_semantics<parallel>], iteration_bounds = array<i64: 1>, scalar_prefetch = 0 : i64, scratch_operands = 0 : i64, tpu.core_type = #tpu.core_type<tc>, window_params = [{transform_indices = @transform_0, window_bounds = array<i64: 16, 16>}, {transform_indices = @transform_1, window_bounds = array<i64: 16, 24>}, {pipeline_mode = #tpu.pipeline_mode<synchronous>, transform_indices = @transform_2, window_bounds = array<i64: 1, 16>}, {pipeline_mode = #tpu.pipeline_mode<synchronous>, transform_indices = @transform_3, window_bounds = array<i64: 1, 16>}, {pipeline_mode = #tpu.pipeline_mode<synchronous>, transform_indices = @transform_4, window_bounds = array<i64: 1, 24>}, {pipeline_mode = #tpu.pipeline_mode<synchronous>, transform_indices = @transform_5, window_bounds = array<i64: 1, 24>}, {pipeline_mode = #tpu.pipeline_mode<synchronous>, transform_indices = @transform_6, window_bounds = array<i64: 16, 128>}, {pipeline_mode = #tpu.pipeline_mode<synchronous>, transform_indices = @transform_7, window_bounds = array<i64: 1, 128>}, {pipeline_mode = #tpu.pipeline_mode<synchronous>, transform_indices = @transform_8, window_bounds = array<i64: 24, 128>}, {pipeline_mode = #tpu.pipeline_mode<synchronous>, transform_indices = @transform_9, window_bounds = array<i64: 1, 128>}, {pipeline_mode = #tpu.pipeline_mode<synchronous>, transform_indices = @transform_10, window_bounds = array<i64: 128, 128>}, {pipeline_mode = #tpu.pipeline_mode<synchronous>, transform_indices = @transform_11, window_bounds = array<i64: 128, 128>}, {pipeline_mode = #tpu.pipeline_mode<synchronous>, transform_indices = @transform_12, window_bounds = array<i64: 1, 128>}, {pipeline_mode = #tpu.pipeline_mode<synchronous>, transform_indices = @transform_13, window_bounds = array<i64: 1, 128>}, {transform_indices = @transform_14, window_bounds = array<i64: 16, 2>}]} {
    %c0 = arith.constant 0 : index
    %c0_0 = arith.constant 0 : index
    %0 = vector.load %arg1[%c0, %c0_0] : memref<16x16xf32, #tpu.memory_space<vmem>>, vector<16x16xf32>
    %c0_1 = arith.constant 0 : index
    %c0_2 = arith.constant 0 : index
    %1 = vector.load %arg3[%c0_1, %c0_2] : memref<1x16xf32, #tpu.memory_space<vmem>>, vector<1x16xf32>
    %2 = vector.broadcast %1 : vector<1x16xf32> to vector<16x16xf32>
    %3 = arith.subf %0, %2 : vector<16x16xf32>
    %c0_3 = arith.constant 0 : index
    %c0_4 = arith.constant 0 : index
    %4 = vector.load %arg4[%c0_3, %c0_4] : memref<1x16xf32, #tpu.memory_space<vmem>>, vector<1x16xf32>
    %5 = vector.broadcast %4 : vector<1x16xf32> to vector<16x16xf32>
    %6 = arith.mulf %3, %5 : vector<16x16xf32>
    %c0_5 = arith.constant 0 : index
    %c0_6 = arith.constant 0 : index
    %7 = vector.load %arg2[%c0_5, %c0_6] : memref<16x24xf32, #tpu.memory_space<vmem>>, vector<16x24xf32>
    %c0_7 = arith.constant 0 : index
    %c0_8 = arith.constant 0 : index
    %8 = vector.load %arg5[%c0_7, %c0_8] : memref<1x24xf32, #tpu.memory_space<vmem>>, vector<1x24xf32>
    %9 = vector.broadcast %8 : vector<1x24xf32> to vector<16x24xf32>
    %10 = arith.subf %7, %9 : vector<16x24xf32>
    %c0_9 = arith.constant 0 : index
    %c0_10 = arith.constant 0 : index
    %11 = vector.load %arg6[%c0_9, %c0_10] : memref<1x24xf32, #tpu.memory_space<vmem>>, vector<1x24xf32>
    %12 = vector.broadcast %11 : vector<1x24xf32> to vector<16x24xf32>
    %13 = arith.mulf %10, %12 : vector<16x24xf32>
    %14 = arith.truncf %6 : vector<16x16xf32> to vector<16x16xbf16>
    %c0_11 = arith.constant 0 : index
    %c0_12 = arith.constant 0 : index
    %15 = vector.load %arg7[%c0_11, %c0_12] : memref<16x128xbf16, #tpu.memory_space<vmem>>, vector<16x128xbf16>
    %cst = arith.constant dense<0.000000e+00> : vector<16x128xf32>
    %16 = tpu.matmul %14, %15, %cst {dimension_numbers = #tpu.dot_dimension_numbers<[1], [0], [0], [1], [0, 0, 1, 1], [], []>} : vector<16x16xbf16>, vector<16x128xbf16>, vector<16x128xf32> -> vector<16x128xf32>
    %c0_13 = arith.constant 0 : index
    %c0_14 = arith.constant 0 : index
    %17 = vector.load %arg8[%c0_13, %c0_14] : memref<1x128xf32, #tpu.memory_space<vmem>>, vector<1x128xf32>
    %18 = vector.broadcast %17 : vector<1x128xf32> to vector<16x128xf32>
    %19 = arith.addf %16, %18 : vector<16x128xf32>
    %cst_15 = arith.constant 0.000000e+00 : f32
    %20 = vector.broadcast %cst_15 : f32 to vector<16x128xf32>
    %21 = arith.cmpf ogt, %19, %20 : vector<16x128xf32>
    %22 = math.exp %19 : vector<16x128xf32>
    %cst_16 = arith.constant 1.000000e+00 : f32
    %23 = vector.broadcast %cst_16 : f32 to vector<16x128xf32>
    %24 = arith.subf %22, %23 : vector<16x128xf32>
    %cst_17 = arith.constant 1.67326319 : f32
    %25 = vector.broadcast %cst_17 : f32 to vector<16x128xf32>
    %26 = arith.mulf %25, %24 : vector<16x128xf32>
    %27 = arith.select %21, %19, %26 : vector<16x128xi1>, vector<16x128xf32>
    %cst_18 = arith.constant 1.05070102 : f32
    %28 = vector.broadcast %cst_18 : f32 to vector<16x128xf32>
    %29 = arith.mulf %28, %27 : vector<16x128xf32>
    %30 = arith.truncf %13 : vector<16x24xf32> to vector<16x24xbf16>
    %c0_19 = arith.constant 0 : index
    %c0_20 = arith.constant 0 : index
    %31 = vector.load %arg9[%c0_19, %c0_20] : memref<24x128xbf16, #tpu.memory_space<vmem>>, vector<24x128xbf16>
    %cst_21 = arith.constant dense<0.000000e+00> : vector<16x128xf32>
    %32 = tpu.matmul %30, %31, %cst_21 {dimension_numbers = #tpu.dot_dimension_numbers<[1], [0], [0], [1], [0, 0, 1, 1], [], []>} : vector<16x24xbf16>, vector<24x128xbf16>, vector<16x128xf32> -> vector<16x128xf32>
    %c0_22 = arith.constant 0 : index
    %c0_23 = arith.constant 0 : index
    %33 = vector.load %arg10[%c0_22, %c0_23] : memref<1x128xf32, #tpu.memory_space<vmem>>, vector<1x128xf32>
    %34 = vector.broadcast %33 : vector<1x128xf32> to vector<16x128xf32>
    %35 = arith.addf %32, %34 : vector<16x128xf32>
    %cst_24 = arith.constant 0.000000e+00 : f32
    %36 = vector.broadcast %cst_24 : f32 to vector<16x128xf32>
    %37 = arith.cmpf ogt, %35, %36 : vector<16x128xf32>
    %38 = math.exp %35 : vector<16x128xf32>
    %cst_25 = arith.constant 1.000000e+00 : f32
    %39 = vector.broadcast %cst_25 : f32 to vector<16x128xf32>
    %40 = arith.subf %38, %39 : vector<16x128xf32>
    %cst_26 = arith.constant 1.67326319 : f32
    %41 = vector.broadcast %cst_26 : f32 to vector<16x128xf32>
    %42 = arith.mulf %41, %40 : vector<16x128xf32>
    %43 = arith.select %37, %35, %42 : vector<16x128xi1>, vector<16x128xf32>
    %cst_27 = arith.constant 1.05070102 : f32
    %44 = vector.broadcast %cst_27 : f32 to vector<16x128xf32>
    %45 = arith.mulf %44, %43 : vector<16x128xf32>
    %46 = arith.mulf %29, %45 : vector<16x128xf32>
    %cst_28 = arith.constant dense<0.000000e+00> : vector<16xf32>
    %47 = vector.multi_reduction <add>, %46, %cst_28 [1] : vector<16x128xf32> to vector<16xf32>
    %48 = vector.shape_cast %47 : vector<16xf32> to vector<16x1xf32>
    %49 = arith.mulf %29, %29 : vector<16x128xf32>
    %cst_29 = arith.constant dense<0.000000e+00> : vector<16xf32>
    %50 = vector.multi_reduction <add>, %49, %cst_29 [1] : vector<16x128xf32> to vector<16xf32>
    %51 = vector.shape_cast %50 : vector<16xf32> to vector<16x1xf32>
    %52 = math.sqrt %51 : vector<16x1xf32>
    %cst_30 = arith.constant 9.99999993E-9 : f32
    %53 = vector.broadcast %cst_30 : f32 to vector<16x1xf32>
    %54 = arith.maximumf %52, %53 : vector<16x1xf32>
    %55 = arith.mulf %45, %45 : vector<16x128xf32>
    %cst_31 = arith.constant dense<0.000000e+00> : vector<16xf32>
    %56 = vector.multi_reduction <add>, %55, %cst_31 [1] : vector<16x128xf32> to vector<16xf32>
    %57 = vector.shape_cast %56 : vector<16xf32> to vector<16x1xf32>
    %58 = math.sqrt %57 : vector<16x1xf32>
    %cst_32 = arith.constant 9.99999993E-9 : f32
    %59 = vector.broadcast %cst_32 : f32 to vector<16x1xf32>
    %60 = arith.maximumf %58, %59 : vector<16x1xf32>
    %61 = arith.mulf %54, %60 : vector<16x1xf32>
    %62 = arith.divf %48, %61 : vector<16x1xf32>
    %63 = arith.truncf %29 : vector<16x128xf32> to vector<16x128xbf16>
    %c0_33 = arith.constant 0 : index
    %c0_34 = arith.constant 0 : index
    %64 = vector.load %arg11[%c0_33, %c0_34] : memref<128x128xbf16, #tpu.memory_space<vmem>>, vector<128x128xbf16>
    %cst_35 = arith.constant dense<0.000000e+00> : vector<16x128xf32>
    %65 = tpu.matmul %63, %64, %cst_35 {dimension_numbers = #tpu.dot_dimension_numbers<[1], [0], [0], [1], [0, 0, 1, 1], [], []>} : vector<16x128xbf16>, vector<128x128xbf16>, vector<16x128xf32> -> vector<16x128xf32>
    %66 = arith.truncf %45 : vector<16x128xf32> to vector<16x128xbf16>
    %c0_36 = arith.constant 0 : index
    %c0_37 = arith.constant 0 : index
    %67 = vector.load %arg12[%c0_36, %c0_37] : memref<128x128xbf16, #tpu.memory_space<vmem>>, vector<128x128xbf16>
    %cst_38 = arith.constant dense<0.000000e+00> : vector<16x128xf32>
    %68 = tpu.matmul %66, %67, %cst_38 {dimension_numbers = #tpu.dot_dimension_numbers<[1], [0], [0], [1], [0, 0, 1, 1], [], []>} : vector<16x128xbf16>, vector<128x128xbf16>, vector<16x128xf32> -> vector<16x128xf32>
    %69 = arith.addf %65, %68 : vector<16x128xf32>
    %c0_39 = arith.constant 0 : index
    %c0_40 = arith.constant 0 : index
    %70 = vector.load %arg13[%c0_39, %c0_40] : memref<1x128xf32, #tpu.memory_space<vmem>>, vector<1x128xf32>
    %71 = vector.broadcast %62 : vector<16x1xf32> to vector<16x128xf32>
    %72 = vector.broadcast %70 : vector<1x128xf32> to vector<16x128xf32>
    %73 = arith.mulf %71, %72 : vector<16x128xf32>
    %74 = arith.addf %69, %73 : vector<16x128xf32>
    %c0_41 = arith.constant 0 : index
    %c0_42 = arith.constant 0 : index
    %75 = vector.load %arg14[%c0_41, %c0_42] : memref<1x128xf32, #tpu.memory_space<vmem>>, vector<1x128xf32>
    %76 = vector.broadcast %75 : vector<1x128xf32> to vector<16x128xf32>
    %77 = arith.addf %74, %76 : vector<16x128xf32>
    %78 = tpu.iota {dimensions = array<i32: 1>} : vector<16x128xi32>
    %c2_i32 = arith.constant 2 : i32
    %79 = vector.broadcast %c2_i32 : i32 to vector<16x128xi32>
    %80 = arith.cmpi slt, %78, %79 : vector<16x128xi32>
    %cst_43 = arith.constant -1.000000e+30 : f32
    %81 = vector.broadcast %cst_43 : f32 to vector<16x128xf32>
    %82 = arith.select %80, %77, %81 : vector<16x128xi1>, vector<16x128xf32>
    %cst_44 = arith.constant dense<0xFF800000> : vector<16xf32>
    %83 = vector.multi_reduction <maximumf>, %82, %cst_44 [1] : vector<16x128xf32> to vector<16xf32>
    %84 = vector.shape_cast %83 : vector<16xf32> to vector<16x1xf32>
    %85 = vector.broadcast %84 : vector<16x1xf32> to vector<16x128xf32>
    %86 = arith.subf %82, %85 : vector<16x128xf32>
    %87 = math.exp %86 : vector<16x128xf32>
    %cst_45 = arith.constant dense<0.000000e+00> : vector<16xf32>
    %88 = vector.multi_reduction <add>, %87, %cst_45 [1] : vector<16x128xf32> to vector<16xf32>
    %89 = vector.shape_cast %88 : vector<16xf32> to vector<16x1xf32>
    %90 = math.log %89 : vector<16x1xf32>
    %91 = vector.extract_strided_slice %86 {offsets = [0, 0], sizes = [16, 2], strides = [1, 1]} : vector<16x128xf32> to vector<16x2xf32>
    %92 = vector.broadcast %90 : vector<16x1xf32> to vector<16x2xf32>
    %93 = arith.subf %91, %92 : vector<16x2xf32>
    %c0_46 = arith.constant 0 : index
    %c0_47 = arith.constant 0 : index
    %94 = vector.load %arg15[%c0_46, %c0_47] : memref<16x2xf32, #tpu.memory_space<vmem>>, vector<16x2xf32>
    tpu.vector_store %arg15[%c0_46, %c0_47], %93 {strides = array<i32>} : memref<16x2xf32, #tpu.memory_space<vmem>>, vector<16x2xf32>,
    return
  }
  func.func @transform_0(%arg0: i32) -> (i32, i32) {
    %c0_i32 = arith.constant 0 : i32
    %c0_i32_0 = arith.constant 0 : i32
    return %arg0, %c0_i32 : i32, i32
  }
  func.func @transform_1(%arg0: i32) -> (i32, i32) {
    %c0_i32 = arith.constant 0 : i32
    %c0_i32_0 = arith.constant 0 : i32
    return %arg0, %c0_i32 : i32, i32
  }
  func.func @transform_2(%arg0: i32) -> (i32, i32) {
    %c0_i32 = arith.constant 0 : i32
    %c0_i32_0 = arith.constant 0 : i32
    %c0_i32_1 = arith.constant 0 : i32
    return %c0_i32, %c0_i32_0 : i32, i32
  }
  func.func @transform_3(%arg0: i32) -> (i32, i32) {
    %c0_i32 = arith.constant 0 : i32
    %c0_i32_0 = arith.constant 0 : i32
    %c0_i32_1 = arith.constant 0 : i32
    return %c0_i32, %c0_i32_0 : i32, i32
  }
  func.func @transform_4(%arg0: i32) -> (i32, i32) {
    %c0_i32 = arith.constant 0 : i32
    %c0_i32_0 = arith.constant 0 : i32
    %c0_i32_1 = arith.constant 0 : i32
    return %c0_i32, %c0_i32_0 : i32, i32
  }
  func.func @transform_5(%arg0: i32) -> (i32, i32) {
    %c0_i32 = arith.constant 0 : i32
    %c0_i32_0 = arith.constant 0 : i32
    %c0_i32_1 = arith.constant 0 : i32
    return %c0_i32, %c0_i32_0 : i32, i32
  }
  func.func @transform_6(%arg0: i32) -> (i32, i32) {
    %c0_i32 = arith.constant 0 : i32
    %c0_i32_0 = arith.constant 0 : i32
    %c0_i32_1 = arith.constant 0 : i32
    return %c0_i32, %c0_i32_0 : i32, i32
  }
  func.func @transform_7(%arg0: i32) -> (i32, i32) {
    %c0_i32 = arith.constant 0 : i32
    %c0_i32_0 = arith.constant 0 : i32
    %c0_i32_1 = arith.constant 0 : i32
    return %c0_i32, %c0_i32_0 : i32, i32
  }
  func.func @transform_8(%arg0: i32) -> (i32, i32) {
    %c0_i32 = arith.constant 0 : i32
    %c0_i32_0 = arith.constant 0 : i32
    %c0_i32_1 = arith.constant 0 : i32
    return %c0_i32, %c0_i32_0 : i32, i32
  }
  func.func @transform_9(%arg0: i32) -> (i32, i32) {
    %c0_i32 = arith.constant 0 : i32
    %c0_i32_0 = arith.constant 0 : i32
    %c0_i32_1 = arith.constant 0 : i32
    return %c0_i32, %c0_i32_0 : i32, i32
  }
  func.func @transform_10(%arg0: i32) -> (i32, i32) {
    %c0_i32 = arith.constant 0 : i32
    %c0_i32_0 = arith.constant 0 : i32
    %c0_i32_1 = arith.constant 0 : i32
    return %c0_i32, %c0_i32_0 : i32, i32
  }
  func.func @transform_11(%arg0: i32) -> (i32, i32) {
    %c0_i32 = arith.constant 0 : i32
    %c0_i32_0 = arith.constant 0 : i32
    %c0_i32_1 = arith.constant 0 : i32
    return %c0_i32, %c0_i32_0 : i32, i32
  }
  func.func @transform_12(%arg0: i32) -> (i32, i32) {
    %c0_i32 = arith.constant 0 : i32
    %c0_i32_0 = arith.constant 0 : i32
    %c0_i32_1 = arith.constant 0 : i32
    return %c0_i32, %c0_i32_0 : i32, i32
  }
  func.func @transform_13(%arg0: i32) -> (i32, i32) {
    %c0_i32 = arith.constant 0 : i32
    %c0_i32_0 = arith.constant 0 : i32
    %c0_i32_1 = arith.constant 0 : i32
    return %c0_i32, %c0_i32_0 : i32, i32
  }
  func.func @transform_14(%arg0: i32) -> (i32, i32) {
    %c0_i32 = arith.constant 0 : i32
    %c0_i32_0 = arith.constant 0 : i32
    return %arg0, %c0_i32 : i32, i32
  }
}

</mosaic_0001>

<llo_original>
// kernel: ffn02_forward.1
$region0: #{ffn02_forward.1}
  #allocation0 [shape = 'u32[]', space=smem, size = 0x4, offset = 0x4, fixed_abs, tag = 'smem constant byte address 0x4 - core index']
  #allocation1 [shape = 'u32[144,128]{1,0:T(1,128)}', space=vmem, size = 0x12000, scoped, tag = 'internal scratch']
  %s0 = inlined_call_operand.vmem [shape: f32[16,16], index: 0, kind: input, shape index: {}]
  %s1 = inlined_call_operand.vmem [shape: f32[16,24], index: 1, kind: input, shape index: {}]
  %s2 = inlined_call_operand.vmem [shape: f32[1,16], index: 2, kind: input, shape index: {}]
  %s3 = inlined_call_operand.vmem [shape: f32[1,16], index: 3, kind: input, shape index: {}]
  %s4 = inlined_call_operand.vmem [shape: f32[1,24], index: 4, kind: input, shape index: {}]
  %s5 = inlined_call_operand.vmem [shape: f32[1,24], index: 5, kind: input, shape index: {}]
  %s6 = inlined_call_operand.vmem [shape: bf16[16,128], index: 6, kind: input, shape index: {}]
  %s7 = inlined_call_operand.vmem [shape: f32[1,128], index: 7, kind: input, shape index: {}]
  %s8 = inlined_call_operand.vmem [shape: bf16[24,128], index: 8, kind: input, shape index: {}]
  %s9 = inlined_call_operand.vmem [shape: f32[1,128], index: 9, kind: input, shape index: {}]
  %s10 = inlined_call_operand.vmem [shape: bf16[128,128], index: 10, kind: input, shape index: {}]
  %s11 = inlined_call_operand.hbm [shape: bf16[128,128], index: 11, kind: input, shape index: {}]
  %s12 = inlined_call_operand.vmem [shape: f32[1,128], index: 12, kind: input, shape index: {}]
  %s13 = inlined_call_operand.vmem [shape: f32[1,128], index: 13, kind: input, shape index: {}]
  %s14 = inlined_call_operand.vmem [shape: f32[16,2], index: 14, kind: output, shape index: {}]
  %s15 = sld [smem:[#allocation0]]
  $region70: #{ffn02_forward.1} parent=0
    _
  %s17 = ssub.s32 1, %s15
  %s18 = scalar_select 0, %s17, %s15
  $region1: #{ffn02_forward.1} parent=0
    #allocation2 [shape = 'u8[32768]{0}', space=vmem, size = 0x8000, scoped, tag = 'input window, operand 11, single buffered']
    #allocation3 [shape = 's32[1]{0}', space=sflag, size = 0x4, scoped, tag = 'scoped memory for ffn02_forward.1']
    %19 = vsyncpa [#allocation3], 0
    // Predicated region
    $region2: #{ffn02_forward.1} parent=1 // pred_check
      _
    $region3: #{ffn02_forward.1} parent=1 // pred_check_branch
      %21 = sbr.rel (0) target = $region5
    $region4: #{ffn02_forward.1} parent=1 // pred_region
      _
    $region5: #{ffn02_forward.1} parent=1 // pred_fallthru
      _
    // Predicated region
    $region6: #{ffn02_forward.1} parent=1 // pred_check
      _
    $region7: #{ffn02_forward.1} parent=1 // pred_check_branch
      %23 = sbr.rel (0) target = $region9
    $region8: #{ffn02_forward.1} parent=1 // pred_region
      _
    $region9: #{ffn02_forward.1} parent=1 // pred_fallthru
      _
    // Predicated region
    $region10: #{ffn02_forward.1} parent=1 // pred_check
      _
    $region11: #{ffn02_forward.1} parent=1 // pred_check_branch
      %25 = sbr.rel (0) target = $region13
    $region12: #{ffn02_forward.1} parent=1 // pred_region
      _
    $region13: #{ffn02_forward.1} parent=1 // pred_fallthru
      _
    // Predicated region
    $region14: #{ffn02_forward.1} parent=1 // pred_check
      _
    $region15: #{ffn02_forward.1} parent=1 // pred_check_branch
      %27 = sbr.rel (0) target = $region17
    $region16: #{ffn02_forward.1} parent=1 // pred_region
      _
    $region17: #{ffn02_forward.1} parent=1 // pred_fallthru
      _
    // Predicated region
    $region18: #{ffn02_forward.1} parent=1 // pred_check
      _
    $region19: #{ffn02_forward.1} parent=1 // pred_check_branch
      %29 = sbr.rel (0) target = $region21
    $region20: #{ffn02_forward.1} parent=1 // pred_region
      _
    $region21: #{ffn02_forward.1} parent=1 // pred_fallthru
      _
    // Predicated region
    $region22: #{ffn02_forward.1} parent=1 // pred_check
      _
    $region23: #{ffn02_forward.1} parent=1 // pred_check_branch
      %31 = sbr.rel (0) target = $region25
    $region24: #{ffn02_forward.1} parent=1 // pred_region
      _
    $region25: #{ffn02_forward.1} parent=1 // pred_fallthru
      _
    // Predicated region
    $region26: #{ffn02_forward.1} parent=1 // pred_check
      _
    $region27: #{ffn02_forward.1} parent=1 // pred_check_branch
      %33 = sbr.rel (0) target = $region29
    $region28: #{ffn02_forward.1} parent=1 // pred_region
      _
    $region29: #{ffn02_forward.1} parent=1 // pred_fallthru
      _
    // Predicated region
    $region30: #{ffn02_forward.1} parent=1 // pred_check
      _
    $region31: #{ffn02_forward.1} parent=1 // pred_check_branch
      %35 = sbr.rel (0) target = $region33
    $region32: #{ffn02_forward.1} parent=1 // pred_region
      _
    $region33: #{ffn02_forward.1} parent=1 // pred_fallthru
      _
    // Predicated region
    $region34: #{ffn02_forward.1} parent=1 // pred_check
      _
    $region35: #{ffn02_forward.1} parent=1 // pred_check_branch
      %37 = sbr.rel (0) target = $region37
    $region36: #{ffn02_forward.1} parent=1 // pred_region
      _
    $region37: #{ffn02_forward.1} parent=1 // pred_fallthru
      _
    // Predicated region
    $region38: #{ffn02_forward.1} parent=1 // pred_check
      _
    $region39: #{ffn02_forward.1} parent=1 // pred_check_branch
      %39 = sbr.rel (0) target = $region41
    $region40: #{ffn02_forward.1} parent=1 // pred_region
      _
    $region41: #{ffn02_forward.1} parent=1 // pred_fallthru
      _
    // Predicated region
    $region42: #{ffn02_forward.1} parent=1 // pred_check
      _
    $region43: #{ffn02_forward.1} parent=1 // pred_check_branch
      %41 = sbr.rel (0) target = $region45
    $region44: #{ffn02_forward.1} parent=1 // pred_region
      _
    $region45: #{ffn02_forward.1} parent=1 // pred_fallthru
      _
    // Predicated region
    $region46: #{ffn02_forward.1} parent=1 // pred_check
      _
    $region47: #{ffn02_forward.1} parent=1 // pred_check_branch
      %43 = sbr.rel (0) target = $region49
    $region48: #{ffn02_forward.1} parent=1 // pred_region
      %s45 = ssub.s32 1024, 1024
      %46 = vsyncadd [#allocation3], %s45
      %s47 = sshll.u32 [#allocation2], 4
      %s48 = int_to_ptr.vmem [resolvable:$true] %s47
      %53 = dma.hbm_to_vmem [thread:$0]  %s11, 1024, %s48, [#allocation3], 64, 64, 4
    $region49: #{ffn02_forward.1} parent=1 // pred_fallthru
      _
    // Predicated region
    $region50: #{ffn02_forward.1} parent=1 // pred_check
      _
    $region51: #{ffn02_forward.1} parent=1 // pred_check_branch
      %55 = sbr.rel (0) target = $region53
    $region52: #{ffn02_forward.1} parent=1 // pred_region
      _
    $region53: #{ffn02_forward.1} parent=1 // pred_fallthru
      _
    // Predicated region
    $region54: #{ffn02_forward.1} parent=1 // pred_check
      _
    $region55: #{ffn02_forward.1} parent=1 // pred_check_branch
      %57 = sbr.rel (0) target = $region57
    $region56: #{ffn02_forward.1} parent=1 // pred_region
      _
    $region57: #{ffn02_forward.1} parent=1 // pred_fallthru
      _
    // Predicated region
    $region58: #{ffn02_forward.1} parent=1 // pred_check
      _
    $region59: #{ffn02_forward.1} parent=1 // pred_check_branch
      %59 = sbr.rel (0) target = $region61
    $region60: #{ffn02_forward.1} parent=1 // pred_region
      %60 = dma.done [#allocation3], 1024
    $region61: #{ffn02_forward.1} parent=1 // pred_fallthru
      _
    %v62 = vld [vmem:[%s0] sm:$0xff]
    %v63 = vld [vmem:[%s0 + $0x8] sm:$0xff]
    %v64 = vld [vmem:[%s2] sm:$0x1]
    %v66 = vlaneseq
    %v67 = vshrl.u32 %v66, 7
    %v68 = vsub.s32 0, %v67
    %v69 = vrot.slane %v64, %v68
    %v71 = vsub.f32 %v62, %v69
    %v72 = vsub.f32 %v63, %v69
    %v73 = vld [vmem:[%s3] sm:$0x1]
    %v75 = vlaneseq
    %v76 = vshrl.u32 %v75, 7
    %v77 = vsub.s32 0, %v76
    %v78 = vrot.slane %v73, %v77
    %v80 = vmul.f32 %v71, %v78
    %v81 = vmul.f32 %v72, %v78
    %v82 = vld [vmem:[%s1] sm:$0xff]
    %v83 = vld [vmem:[%s1 + $0x8] sm:$0xff]
    %v84 = vld [vmem:[%s4] sm:$0x1]
    %v86 = vlaneseq
    %v87 = vshrl.u32 %v86, 7
    %v88 = vsub.s32 0, %v87
    %v89 = vrot.slane %v84, %v88
    %v91 = vsub.f32 %v82, %v89
    %v92 = vsub.f32 %v83, %v89
    %v93 = vld [vmem:[%s5] sm:$0x1]
    %v95 = vlaneseq
    %v96 = vshrl.u32 %v95, 7
    %v97 = vsub.s32 0, %v96
    %v98 = vrot.slane %v93, %v97
    %v100 = vmul.f32 %v91, %v98
    %v101 = vmul.f32 %v92, %v98
    %v102 = vpack.c.bf16 %v81, %v80
    %v103 = vld [vmem:[%s6] sm:$0xf]
    %v104 = vld [vmem:[%s6 + $0x4] sm:$0xf]
    %v105 = vld [vmem:[%s7] sm:$0x1]
    %v107 = vlaneseq
    %v108 = vshrl.u32 %v107, 7
    %v109 = vsub.s32 0, %v108
    %v110 = vrot.slane %v105, %v109
    %v114 = vunpack.c.l.b16 %v103
    %v115 = vunpack.c.l.b16 %v104
    %v116 = vpack.c.b16 %v115, %v114
    %vm118 = vcmask 130048
    %v120 = vsel %vm118, %v102, 0
    %122 = vmatprep.subr.bf16.mxu0 0
    %123 = vmatpush1.bf16.msra.mxu0 %v116
    %124 = vmatprep.subr.bf16.mxu0 0
    %125 = vmatpush1.bf16.msra.mxu0 0
    %126 = vmatprep.subr.bf16.mxu0 0
    %127 = vmatpush1.bf16.msra.mxu0 0
    %128 = vmatprep.subr.bf16.mxu0 0
    %129 = vmatpush1.bf16.msra.mxu0 0
    %130 = vmatprep.subr.bf16.mxu0 0
    %131 = vmatpush1.bf16.msra.mxu0 0
    %132 = vmatprep.subr.bf16.mxu0 0
    %133 = vmatpush1.bf16.msra.mxu0 0
    %134 = vmatprep.subr.bf16.mxu0 0
    %135 = vmatpush1.bf16.msra.mxu0 0
    %136 = vmatprep.subr.bf16.mxu0 0
    %137 = vmatpush1.bf16.msra.mxu0 0
    %138 = vmatprep.subr.bf16.mxu0 0
    %139 = vmatpush1.bf16.msra.mxu0 0
    %140 = vmatprep.subr.bf16.mxu0 0
    %141 = vmatpush1.bf16.msra.mxu0 0
    %142 = vmatprep.subr.bf16.mxu0 0
    %143 = vmatpush1.bf16.msra.mxu0 0
    %144 = vmatprep.subr.bf16.mxu0 0
    %145 = vmatpush1.bf16.msra.mxu0 0
    %146 = vmatprep.subr.bf16.mxu0 0
    %147 = vmatpush1.bf16.msra.mxu0 0
    %148 = vmatprep.subr.bf16.mxu0 0
    %149 = vmatpush1.bf16.msra.mxu0 0
    %150 = vmatprep.subr.bf16.mxu0 0
    %151 = vmatpush1.bf16.msra.mxu0 0
    %152 = vmatprep.subr.bf16.mxu0 0
    %153 = vmatpush1.bf16.msra.mxu0 0
    %154 = vmatprep.mubr.bf16.mxu0 0
    %155 = vmatmul.mubr.bf16.gmra.mrb[0].mxu0 %v120
    %v156 = vpop.f32.mrb[0].mxu0
    %v157 = vadd.f32 %v110, %v156
    %v158 = vpop.f32.mrb[0].mxu0
    %v159 = vpop.f32.mrb[0].mxu0
    %v160 = vadd.f32 %v110, %v159
    %v161 = vpop.f32.mrb[0].mxu0
    %162 = vdwg.mxu0
    %vm163 = vcmp.gt.f32.partialorder %v157, 0.0
    %vm164 = vcmp.gt.f32.partialorder %v160, 0.0
    %v165 = vmul.f32 %v157, 1.442695
    %v166 = vpow.pop %v165
    %v167 = vmul.f32 %v160, 1.442695
    %v168 = vpow.pop %v167
    %v169 = vsub.f32 %v166, 1.0
    %v170 = vsub.f32 %v168, 1.0
    %v171 = vmul.f32 %v169, 1.6732632
    %v172 = vmul.f32 %v170, 1.6732632
    %v173 = vsel %vm163, %v157, %v171
    %v174 = vsel %vm164, %v160, %v172
    %v175 = vmul.f32 %v173, 1.050701
    %v176 = vmul.f32 %v174, 1.050701
    %v177 = vpack.c.bf16 %v101, %v100
    %v178 = vld [vmem:[%s8] sm:$0xf]
    %v179 = vld [vmem:[%s8 + $0x4] sm:$0xf]
    %v180 = vld [vmem:[%s8 + $0x8] sm:$0xf]
    %v181 = vld [vmem:[%s9] sm:$0x1]
    %v183 = vlaneseq
    %v184 = vshrl.u32 %v183, 7
    %v185 = vsub.s32 0, %v184
    %v186 = vrot.slane %v181, %v185
    %v191 = vunpack.c.l.b16 %v178
    %v192 = vunpack.c.l.b16 %v179
    %v193 = vunpack.c.l.b16 %v180
    %v194 = vpack.c.b16 %v192, %v191
    %v195 = vpack.c.b16 %v193, %v193
    %vm197 = vcmask 195584
    %v199 = vsel %vm197, %v177, 0
    %vm201 = vcmask 1043456
    %v203 = vsel %vm201, %v195, 0
    %205 = vmatprep.subr.bf16.mxu0 0
    %206 = vmatpush1.bf16.msra.mxu0 %v194
    %207 = vmatprep.subr.bf16.mxu0 0
    %208 = vmatpush1.bf16.msra.mxu0 %v203
    %209 = vmatprep.subr.bf16.mxu0 0
    %210 = vmatpush1.bf16.msra.mxu0 0
    %211 = vmatprep.subr.bf16.mxu0 0
    %212 = vmatpush1.bf16.msra.mxu0 0
    %213 = vmatprep.subr.bf16.mxu0 0
    %214 = vmatpush1.bf16.msra.mxu0 0
    %215 = vmatprep.subr.bf16.mxu0 0
    %216 = vmatpush1.bf16.msra.mxu0 0
    %217 = vmatprep.subr.bf16.mxu0 0
    %218 = vmatpush1.bf16.msra.mxu0 0
    %219 = vmatprep.subr.bf16.mxu0 0
    %220 = vmatpush1.bf16.msra.mxu0 0
    %221 = vmatprep.subr.bf16.mxu0 0
    %222 = vmatpush1.bf16.msra.mxu0 0
    %223 = vmatprep.subr.bf16.mxu0 0
    %224 = vmatpush1.bf16.msra.mxu0 0
    %225 = vmatprep.subr.bf16.mxu0 0
    %226 = vmatpush1.bf16.msra.mxu0 0
    %227 = vmatprep.subr.bf16.mxu0 0
    %228 = vmatpush1.bf16.msra.mxu0 0
    %229 = vmatprep.subr.bf16.mxu0 0
    %230 = vmatpush1.bf16.msra.mxu0 0
    %231 = vmatprep.subr.bf16.mxu0 0
    %232 = vmatpush1.bf16.msra.mxu0 0
    %233 = vmatprep.subr.bf16.mxu0 0
    %234 = vmatpush1.bf16.msra.mxu0 0
    %235 = vmatprep.subr.bf16.mxu0 0
    %236 = vmatpush1.bf16.msra.mxu0 0
    %237 = vmatprep.mubr.bf16.mxu0 0
    %238 = vmatmul.mubr.bf16.gmra.mrb[0].mxu0 %v199
    %v239 = vpop.f32.mrb[0].mxu0
    %v240 = vadd.f32 %v186, %v239
    %v241 = vpop.f32.mrb[0].mxu0
    %v242 = vpop.f32.mrb[0].mxu0
    %v243 = vadd.f32 %v186, %v242
    %v244 = vpop.f32.mrb[0].mxu0
    %245 = vdwg.mxu0
    %vm246 = vcmp.gt.f32.partialorder %v240, 0.0
    %vm247 = vcmp.gt.f32.partialorder %v243, 0.0
    %v248 = vmul.f32 %v240, 1.442695
    %v249 = vpow.pop %v248
    %v250 = vmul.f32 %v243, 1.442695
    %v251 = vpow.pop %v250
    %v252 = vsub.f32 %v249, 1.0
    %v253 = vsub.f32 %v251, 1.0
    %v254 = vmul.f32 %v252, 1.6732632
    %v255 = vmul.f32 %v253, 1.6732632
    %v256 = vsel %vm246, %v240, %v254
    %v257 = vsel %vm247, %v243, %v255
    %v258 = vmul.f32 %v256, 1.050701
    %v259 = vmul.f32 %v257, 1.050701
    %v260 = vmul.f32 %v175, %v258
    %v261 = vmul.f32 %v176, %v259
    %262 = vadd.xlane.f32.xlu0 %v260
    %v263 = vpop.xlane.xlu0 %262
    %264 = vadd.xlane.f32.xlu0 %v261
    %v265 = vpop.xlane.xlu0 %264
    %v266 = vmul.f32 %v175, %v175
    %v267 = vmul.f32 %v176, %v176
    %268 = vadd.xlane.f32.xlu0 %v266
    %v269 = vpop.xlane.xlu0 %268
    %270 = vadd.xlane.f32.xlu0 %v267
    %v271 = vpop.xlane.xlu0 %270
    %v272 = vrsqrt.pop %v269
    %v273 = vmul.f32 %v269, %v272
    %vm274 = vcmp.eq.f32.partialorder %v269, inf
    %v275 = vsel %vm274, %v269, %v273
    %vm276 = vcmp.eq.f32.partialorder %v269, 0.0
    %v277 = vand.u32 %v269, 2147483648
    %v278 = vsel %vm276, %v277, %v275
    %v279 = vrsqrt.pop %v271
    %v280 = vmul.f32 %v271, %v279
    %vm281 = vcmp.eq.f32.partialorder %v271, inf
    %v282 = vsel %vm281, %v271, %v280
    %vm283 = vcmp.eq.f32.partialorder %v271, 0.0
    %v284 = vand.u32 %v271, 2147483648
    %v285 = vsel %vm283, %v284, %v282
    %v286 = vmax.f32 %v278, 1e-08
    %v287 = vmax.f32 %v285, 1e-08
    %v288 = vmul.f32 %v258, %v258
    %v289 = vmul.f32 %v259, %v259
    %290 = vadd.xlane.f32.xlu0 %v288
    %v291 = vpop.xlane.xlu0 %290
    %292 = vadd.xlane.f32.xlu0 %v289
    %v293 = vpop.xlane.xlu0 %292
    %v294 = vrsqrt.pop %v291
    %v295 = vmul.f32 %v291, %v294
    %vm296 = vcmp.eq.f32.partialorder %v291, inf
    %v297 = vsel %vm296, %v291, %v295
    %vm298 = vcmp.eq.f32.partialorder %v291, 0.0
    %v299 = vand.u32 %v291, 2147483648
    %v300 = vsel %vm298, %v299, %v297
    %v301 = vrsqrt.pop %v293
    %v302 = vmul.f32 %v293, %v301
    %vm303 = vcmp.eq.f32.partialorder %v293, inf
    %v304 = vsel %vm303, %v293, %v302
    %vm305 = vcmp.eq.f32.partialorder %v293, 0.0
    %v306 = vand.u32 %v293, 2147483648
    %v307 = vsel %vm305, %v306, %v304
    %v308 = vmax.f32 %v300, 1e-08
    %v309 = vmax.f32 %v307, 1e-08
    %v310 = vmul.f32 %v286, %v308
    %v311 = vmul.f32 %v287, %v309
    %v312 = vrcp.pop %v310
    %v313 = vmul.f32 %v263, %v312
    %v314 = vrcp.pop %v311
    %v315 = vmul.f32 %v265, %v314
    %v316 = vpack.c.bf16 %v176, %v175
    %v317 = vld [vmem:[%s10] sm:$0xf]
    %v318 = vld [vmem:[%s10 + $0x4] sm:$0xf]
    %v319 = vld [vmem:[%s10 + $0x8] sm:$0xf]
    %v320 = vld [vmem:[%s10 + $0xc] sm:$0xf]
    %v321 = vld [vmem:[%s10 + $0x10] sm:$0xf]
    %v322 = vld [vmem:[%s10 + $0x14] sm:$0xf]
    %v323 = vld [vmem:[%s10 + $0x18] sm:$0xf]
    %v324 = vld [vmem:[%s10 + $0x1c] sm:$0xf]
    %v325 = vld [vmem:[%s10 + $0x20] sm:$0xf]
    %v326 = vld [vmem:[%s10 + $0x24] sm:$0xf]
    %v327 = vld [vmem:[%s10 + $0x28] sm:$0xf]
    %v328 = vld [vmem:[%s10 + $0x2c] sm:$0xf]
    %v329 = vld [vmem:[%s10 + $0x30] sm:$0xf]
    %v330 = vld [vmem:[%s10 + $0x34] sm:$0xf]
    %v331 = vld [vmem:[%s10 + $0x38] sm:$0xf]
    %v332 = vld [vmem:[%s10 + $0x3c] sm:$0xf]
    %v333 = vpack.c.bf16 %v259, %v258
    %v334 = vld [vmem:[#allocation2] sm:$0xf]
    %v335 = vld [vmem:[#allocation2 + $0x4] sm:$0xf]
    %v336 = vld [vmem:[#allocation2 + $0x8] sm:$0xf]
    %v337 = vld [vmem:[#allocation2 + $0xc] sm:$0xf]
    %v338 = vld [vmem:[#allocation2 + $0x10] sm:$0xf]
    %v339 = vld [vmem:[#allocation2 + $0x14] sm:$0xf]
    %v340 = vld [vmem:[#allocation2 + $0x18] sm:$0xf]
    %v341 = vld [vmem:[#allocation2 + $0x1c] sm:$0xf]
    %v342 = vld [vmem:[#allocation2 + $0x20] sm:$0xf]
    %v343 = vld [vmem:[#allocation2 + $0x24] sm:$0xf]
    %v344 = vld [vmem:[#allocation2 + $0x28] sm:$0xf]
    %v345 = vld [vmem:[#allocation2 + $0x2c] sm:$0xf]
    %v346 = vld [vmem:[#allocation2 + $0x30] sm:$0xf]
    %v347 = vld [vmem:[#allocation2 + $0x34] sm:$0xf]
    %v348 = vld [vmem:[#allocation2 + $0x38] sm:$0xf]
    %v349 = vld [vmem:[#allocation2 + $0x3c] sm:$0xf]
    %v366 = vunpack.c.l.b16 %v334
    %v367 = vunpack.c.l.b16 %v335
    %v368 = vunpack.c.l.b16 %v336
    %v369 = vunpack.c.l.b16 %v337
    %v370 = vunpack.c.l.b16 %v338
    %v371 = vunpack.c.l.b16 %v339
    %v372 = vunpack.c.l.b16 %v340
    %v373 = vunpack.c.l.b16 %v341
    %v374 = vunpack.c.l.b16 %v342
    %v375 = vunpack.c.l.b16 %v343
    %v376 = vunpack.c.l.b16 %v344
    %v377 = vunpack.c.l.b16 %v345
    %v378 = vunpack.c.l.b16 %v346
    %v379 = vunpack.c.l.b16 %v347
    %v380 = vunpack.c.l.b16 %v348
    %v381 = vunpack.c.l.b16 %v349
    %v382 = vpack.c.b16 %v367, %v366
    %v383 = vpack.c.b16 %v369, %v368
    %v384 = vpack.c.b16 %v371, %v370
    %v385 = vpack.c.b16 %v373, %v372
    %v386 = vpack.c.b16 %v375, %v374
    %v387 = vpack.c.b16 %v377, %v376
    %v388 = vpack.c.b16 %v379, %v378
    %v389 = vpack.c.b16 %v381, %v380
    %398 = vmatprep.subr.bf16.mxu0 0
    %399 = vmatpush1.bf16.msra.mxu0 %v382
    %400 = vmatprep.subr.bf16.mxu0 0
    %401 = vmatpush1.bf16.msra.mxu0 %v383
    %402 = vmatprep.subr.bf16.mxu0 0
    %403 = vmatpush1.bf16.msra.mxu0 %v384
    %404 = vmatprep.subr.bf16.mxu0 0
    %405 = vmatpush1.bf16.msra.mxu0 %v385
    %406 = vmatprep.subr.bf16.mxu0 0
    %407 = vmatpush1.bf16.msra.mxu0 %v386
    %408 = vmatprep.subr.bf16.mxu0 0
    %409 = vmatpush1.bf16.msra.mxu0 %v387
    %410 = vmatprep.subr.bf16.mxu0 0
    %411 = vmatpush1.bf16.msra.mxu0 %v388
    %412 = vmatprep.subr.bf16.mxu0 0
    %413 = vmatpush1.bf16.msra.mxu0 %v389
    %414 = vmatprep.subr.bf16.mxu0 0
    %415 = vmatpush1.bf16.msra.mxu0 0
    %416 = vmatprep.subr.bf16.mxu0 0
    %417 = vmatpush1.bf16.msra.mxu0 0
    %418 = vmatprep.subr.bf16.mxu0 0
    %419 = vmatpush1.bf16.msra.mxu0 0
    %420 = vmatprep.subr.bf16.mxu0 0
    %421 = vmatpush1.bf16.msra.mxu0 0
    %422 = vmatprep.subr.bf16.mxu0 0
    %423 = vmatpush1.bf16.msra.mxu0 0
    %424 = vmatprep.subr.bf16.mxu0 0
    %425 = vmatpush1.bf16.msra.mxu0 0
    %426 = vmatprep.subr.bf16.mxu0 0
    %427 = vmatpush1.bf16.msra.mxu0 0
    %428 = vmatprep.subr.bf16.mxu0 0
    %429 = vmatpush1.bf16.msra.mxu0 0
    %430 = vmatprep.mubr.bf16.mxu0 0
    %431 = vmatmul.mubr.bf16.gmra.mrb[0].mxu0 %v333
    %v432 = vpop.f32.mrb[0].mxu0
    %v433 = vadd.f32 0.0, %v432
    %v434 = vpop.f32.mrb[0].mxu0
    %v435 = vpop.f32.mrb[0].mxu0
    %v436 = vadd.f32 0.0, %v435
    %v437 = vpop.f32.mrb[0].mxu0
    %438 = vdwg.mxu0
    %v455 = vunpack.c.l.b16 %v317
    %v456 = vunpack.c.l.b16 %v318
    %v457 = vunpack.c.l.b16 %v319
    %v458 = vunpack.c.l.b16 %v320
    %v459 = vunpack.c.l.b16 %v321
    %v460 = vunpack.c.l.b16 %v322
    %v461 = vunpack.c.l.b16 %v323
    %v462 = vunpack.c.l.b16 %v324
    %v463 = vunpack.c.l.b16 %v325
    %v464 = vunpack.c.l.b16 %v326
    %v465 = vunpack.c.l.b16 %v327
    %v466 = vunpack.c.l.b16 %v328
    %v467 = vunpack.c.l.b16 %v329
    %v468 = vunpack.c.l.b16 %v330
    %v469 = vunpack.c.l.b16 %v331
    %v470 = vunpack.c.l.b16 %v332
    %v471 = vpack.c.b16 %v456, %v455
    %v472 = vpack.c.b16 %v458, %v457
    %v473 = vpack.c.b16 %v460, %v459
    %v474 = vpack.c.b16 %v462, %v461
    %v475 = vpack.c.b16 %v464, %v463
    %v476 = vpack.c.b16 %v466, %v465
    %v477 = vpack.c.b16 %v468, %v467
    %v478 = vpack.c.b16 %v470, %v469
    %487 = vmatprep.subr.bf16.mxu0 0
    %488 = vmatpush1.bf16.msra.mxu0 %v471
    %489 = vmatprep.subr.bf16.mxu0 0
    %490 = vmatpush1.bf16.msra.mxu0 %v472
    %491 = vmatprep.subr.bf16.mxu0 0
    %492 = vmatpush1.bf16.msra.mxu0 %v473
    %493 = vmatprep.subr.bf16.mxu0 0
    %494 = vmatpush1.bf16.msra.mxu0 %v474
    %495 = vmatprep.subr.bf16.mxu0 0
    %496 = vmatpush1.bf16.msra.mxu0 %v475
    %497 = vmatprep.subr.bf16.mxu0 0
    %498 = vmatpush1.bf16.msra.mxu0 %v476
    %499 = vmatprep.subr.bf16.mxu0 0
    %500 = vmatpush1.bf16.msra.mxu0 %v477
    %501 = vmatprep.subr.bf16.mxu0 0
    %502 = vmatpush1.bf16.msra.mxu0 %v478
    %503 = vmatprep.subr.bf16.mxu0 0
    %504 = vmatpush1.bf16.msra.mxu0 0
    %505 = vmatprep.subr.bf16.mxu0 0
    %506 = vmatpush1.bf16.msra.mxu0 0
    %507 = vmatprep.subr.bf16.mxu0 0
    %508 = vmatpush1.bf16.msra.mxu0 0
    %509 = vmatprep.subr.bf16.mxu0 0
    %510 = vmatpush1.bf16.msra.mxu0 0
    %511 = vmatprep.subr.bf16.mxu0 0
    %512 = vmatpush1.bf16.msra.mxu0 0
    %513 = vmatprep.subr.bf16.mxu0 0
    %514 = vmatpush1.bf16.msra.mxu0 0
    %515 = vmatprep.subr.bf16.mxu0 0
    %516 = vmatpush1.bf16.msra.mxu0 0
    %517 = vmatprep.subr.bf16.mxu0 0
    %518 = vmatpush1.bf16.msra.mxu0 0
    %519 = vmatprep.mubr.bf16.mxu0 0
    %520 = vmatmul.mubr.bf16.gmra.mrb[0].mxu0 %v316
    %v521 = vpop.f32.mrb[0].mxu0
    %v522 = vadd.f32 %v433, %v521
    %v523 = vpop.f32.mrb[0].mxu0
    %v524 = vpop.f32.mrb[0].mxu0
    %v525 = vadd.f32 %v436, %v524
    %v526 = vpop.f32.mrb[0].mxu0
    %527 = vdwg.mxu0
    %v528 = vld [vmem:[%s12] sm:$0x1]
    %v530 = vlaneseq
    %v531 = vshrl.u32 %v530, 7
    %v532 = vsub.s32 0, %v531
    %v533 = vrot.slane %v528, %v532
    %v535 = vmul.f32 %v313, %v533
    %v536 = vmul.f32 %v315, %v533
    %v537 = vadd.f32 %v522, %v535
    %v538 = vadd.f32 %v525, %v536
    %v539 = vld [vmem:[%s13] sm:$0x1]
    %v541 = vlaneseq
    %v542 = vshrl.u32 %v541, 7
    %v543 = vsub.s32 0, %v542
    %v544 = vrot.slane %v539, %v543
    %v546 = vadd.f32 %v537, %v544
    %v547 = vadd.f32 %v538, %v544
    %v548 = vlaneseq
    %v549 = vand.u32 %v548, 127
    %vm550 = vcmp.lt.s32.totalorder %v549, 2
    %v551 = vsel %vm550, %v546, -1e+30
    %v552 = vsel %vm550, %v547, -1e+30
    %553 = vmax.xlane.f32.xlu0 %v551
    %v554 = vpop.xlane.xlu0 %553
    %555 = vmax.xlane.f32.xlu0 %v552
    %v556 = vpop.xlane.xlu0 %555
    %v557 = vsub.f32 %v551, %v554
    %v558 = vsub.f32 %v552, %v556
    %v559 = vmul.f32 %v557, 1.442695
    %v560 = vpow.pop %v559
    %v561 = vmul.f32 %v558, 1.442695
    %v562 = vpow.pop %v561
    %563 = vadd.xlane.f32.xlu0 %v560
    %v564 = vpop.xlane.xlu0 %563
    %565 = vadd.xlane.f32.xlu0 %v562
    %v566 = vpop.xlane.xlu0 %565
    %v567 = vlog2.pop %v564
    %v568 = vmul.f32 %v567, 0.6931472
    %v569 = vlog2.pop %v566
    %v570 = vmul.f32 %v569, 0.6931472
    %v571 = vsub.f32 %v557, %v568
    %v572 = vsub.f32 %v558, %v570
    %vm573 = vcmask 15360
    %574 = vst.msk [vmem:[%s14] sm:$0xff] %vm573, %v571
    %575 = vst.msk [vmem:[%s14 + $0x8] sm:$0xff] %vm573, %v572
    // Predicated region
    $region62: #{ffn02_forward.1} parent=1 // pred_check
      _
    $region63: #{ffn02_forward.1} parent=1 // pred_check_branch
      %577 = sbr.rel (0) target = $region65
    $region64: #{ffn02_forward.1} parent=1 // pred_region
      _
    $region65: #{ffn02_forward.1} parent=1 // pred_fallthru
      _
    // Predicated region
    $region66: #{ffn02_forward.1} parent=1 // pred_check
      _
    $region67: #{ffn02_forward.1} parent=1 // pred_check_branch
      %579 = sbr.rel (0) target = $region69
    $region68: #{ffn02_forward.1} parent=1 // pred_region
      _
    $region69: #{ffn02_forward.1} parent=1 // pred_fallthru
      _
    %580 = vsyncpa [#allocation3], 1

</llo_original>
